<compile_context>
chip_gen: v7x
topology: tpu7x:2x2x1
jax: 0.10.0
libtpu: 0.0.40
codegen_flags: <defaults>
</compile_context>

<pallas_src>
import functools
import math

import jax
import jax.numpy as jnp
from jax.experimental import pallas as pl
from jax.experimental.pallas import tpu as pltpu

LANE = 128      # vreg lane width
SUBLANE = 8     # f32 sublane count


def _round_up(x, m):
    return ((x + m - 1) // m) * m


def hypergraph_conv_kernel(node_ref, hyper_t_ref, w_t_ref, b_ref, out_ref, *,
                           n_hyper):
    """Single-block HyperGraphConv forward.

    node_ref    : [Np, Dp]  bf16  node embeddings (zero padded)
    hyper_t_ref : [Dp, Hp]  bf16  hyperedge embeddings, pre-transposed
    w_t_ref     : [Dp, Op]  bf16  linear weight, pre-transposed
    b_ref       : [1,  Op]  f32   linear bias (padded)
    out_ref     : [Np, Op]  f32
    """
    node = node_ref[...]          # bf16 [Np, Dp]
    hyper_t = hyper_t_ref[...]    # bf16 [Dp, Hp]

    # logits[n, h] = <node_n, hyper_h>  (mode == 'dot')  -- MXU, f32 accum
    logits = jnp.dot(node, hyper_t, preferred_element_type=jnp.float32)

    # Padded hyperedge columns must not receive attention weight.
    col = jax.lax.broadcasted_iota(jnp.int32, logits.shape, 1)
    logits = jnp.where(col < n_hyper, logits, -jnp.inf)

    # softmax over hyperedges (dim=1), kept in f32 on VPU/EUP
    m = jnp.max(logits, axis=1, keepdims=True)
    e = jnp.exp(logits - m)
    inv = pl.reciprocal(jnp.sum(e, axis=1, keepdims=True), approx=True)
    weights = e * inv                                        # [Np, Hp] f32

    w_bf16 = weights.astype(jnp.bfloat16)

    # hyper_emb = weights.T @ node, without materializing a transpose -- MXU
    hyper_emb = jax.lax.dot_general(
        w_bf16, node,
        dimension_numbers=(((0,), (0,)), ((), ())),
        preferred_element_type=jnp.float32)                  # [Hp, Dp]

    # updated_node = weights @ hyper_emb -- MXU
    updated = jnp.dot(w_bf16, hyper_emb.astype(jnp.bfloat16),
                      preferred_element_type=jnp.float32)    # [Np, Dp]

    # linear (pre-transposed weight) + bias + ReLU; epilogue in f32 -- MXU/VPU
    out = jnp.dot(updated.astype(jnp.bfloat16), w_t_ref[...],
                  preferred_element_type=jnp.float32) + b_ref[...]
    out_ref[...] = jnp.maximum(out, 0.0).astype(out_ref.dtype)


def hypergraph_conv(node_em, hyper, lin_w, lin_b):
    """node_em: [N, dim_in]; hyper: [H, dim_in];
    lin_w: [dim_out, dim_in]; lin_b: [dim_out] -> returns [N, dim_out] f32."""
    n, dim_in = node_em.shape
    n_h = hyper.shape[0]
    dim_out = lin_w.shape[0]

    n_pad = _round_up(n, SUBLANE)
    d_pad = _round_up(dim_in, LANE)
    h_pad = _round_up(n_h, LANE)
    o_pad = _round_up(dim_out, LANE)

    # Lane-dense, pre-transposed, bf16 MXU operands (zero padding is exact in
    # bf16; softmax / bias / ReLU stay f32 inside the kernel).
    node_p = jnp.zeros((n_pad, d_pad), jnp.bfloat16).at[:n, :dim_in].set(
        node_em.astype(jnp.bfloat16))
    hyper_t = jnp.zeros((d_pad, h_pad), jnp.bfloat16).at[:dim_in, :n_h].set(
        hyper.T.astype(jnp.bfloat16))
    w_t = jnp.zeros((d_pad, o_pad), jnp.bfloat16).at[:dim_in, :dim_out].set(
        lin_w.T.astype(jnp.bfloat16))
    b_p = jnp.zeros((1, o_pad), jnp.float32).at[0, :dim_out].set(
        lin_b.astype(jnp.float32))

    kernel = functools.partial(hypergraph_conv_kernel, n_hyper=n_h)

    out = pl.pallas_call(
        kernel,
        out_shape=jax.ShapeDtypeStruct((n_pad, o_pad), jnp.float32),
        in_specs=[
            pl.BlockSpec((n_pad, d_pad), lambda: (0, 0)),
            pl.BlockSpec((d_pad, h_pad), lambda: (0, 0)),
            pl.BlockSpec((d_pad, o_pad), lambda: (0, 0)),
            pl.BlockSpec((1, o_pad), lambda: (0, 0)),
        ],
        out_specs=pl.BlockSpec((n_pad, o_pad), lambda: (0, 0)),
        compiler_params=pltpu.CompilerParams(
            vmem_limit_bytes=16 * 1024 * 1024),
    )(node_p, hyper_t, w_t, b_p)

    # Strip lane/sublane padding back to the module's shapes.
    return out[:n, :dim_out]


def _reference(node_em, hyper, lin_w, lin_b):
    logits = node_em @ hyper.T
    weights = jax.nn.softmax(logits, axis=1)
    hyper_emb = weights.T @ node_em
    updated = weights @ hyper_emb
    return jax.nn.relu(updated @ lin_w.T + lin_b)


if __name__ == "__main__":
    # Small shapes consistent with the module.
    N_NODE, DIM_IN, DIM_OUT, N_H = 16, 32, 32, 8

    key = jax.random.PRNGKey(0)
    k_node, k_hyper, k_w, k_b = jax.random.split(key, 4)

    node_em = jax.random.normal(k_node, (N_NODE, DIM_IN), dtype=jnp.float32)

    # nn.Parameter(hyper) with xavier_uniform_: bound = sqrt(6/(fan_in+fan_out))
    xav = math.sqrt(6.0 / (N_H + DIM_IN))
    hyper = jax.random.uniform(k_hyper, (N_H, DIM_IN), minval=-xav, maxval=xav,
                               dtype=jnp.float32)

    # nn.Linear(dim_in, dim_out): weight [dim_out, dim_in], bias [dim_out]
    w_bound = 1.0 / math.sqrt(DIM_IN)
    lin_w = jax.random.uniform(k_w, (DIM_OUT, DIM_IN), minval=-w_bound,
                               maxval=w_bound, dtype=jnp.float32)
    lin_b = jax.random.uniform(k_b, (DIM_OUT,), minval=-w_bound,
                               maxval=w_bound, dtype=jnp.float32)

    # TODO(synk): training-mode F.dropout on `hyper` (stochastic mask) is not
    # reproduced; eval-mode (identity) semantics are implemented.
    # TODO(synk): mode='mlp' edge scorer and the weights_override path are not
    # implemented (module configured here with mode='dot', no override).
    out = hypergraph_conv(node_em, hyper, lin_w, lin_b)
    out = jax.block_until_ready(out)

    ref = _reference(node_em, hyper, lin_w, lin_b)
    assert out.shape == (N_NODE, DIM_OUT)
    # bf16 MXU operands (f32 accumulation) -> tolerance loosened vs pure-f32.
    assert jnp.allclose(out, ref, atol=5e-2, rtol=5e-2)

    print("KERNEL_OK")
</pallas_src>

<mosaic_0001>
module attributes {stable_mosaic.version = 11 : i64} {
  func.func @hypergraph_conv_kernel(%arg0: memref<16x128xbf16, #tpu.memory_space<vmem>>, %arg1: memref<128x128xbf16, #tpu.memory_space<vmem>>, %arg2: memref<128x128xbf16, #tpu.memory_space<vmem>>, %arg3: memref<1x128xf32, #tpu.memory_space<vmem>>, %arg4: memref<16x128xf32, #tpu.memory_space<vmem>>) attributes {dimension_semantics = [], scalar_prefetch = 0 : i64, scratch_operands = 0 : i64, tpu.core_type = #tpu.core_type<tc>} {
    %c0 = arith.constant 0 : index
    %c0_0 = arith.constant 0 : index
    %0 = vector.load %arg0[%c0, %c0_0] : memref<16x128xbf16, #tpu.memory_space<vmem>>, vector<16x128xbf16>
    %c0_1 = arith.constant 0 : index
    %c0_2 = arith.constant 0 : index
    %1 = vector.load %arg1[%c0_1, %c0_2] : memref<128x128xbf16, #tpu.memory_space<vmem>>, vector<128x128xbf16>
    %cst = arith.constant dense<0.000000e+00> : vector<16x128xf32>
    %2 = tpu.matmul %0, %1, %cst {dimension_numbers = #tpu.dot_dimension_numbers<[1], [0], [0], [1], [0, 0, 1, 1], [], []>} : vector<16x128xbf16>, vector<128x128xbf16>, vector<16x128xf32> -> vector<16x128xf32>
    %3 = tpu.iota {dimensions = array<i32: 1>} : vector<16x128xi32>
    %c8_i32 = arith.constant 8 : i32
    %4 = vector.broadcast %c8_i32 : i32 to vector<16x128xi32>
    %5 = arith.cmpi slt, %3, %4 : vector<16x128xi32>
    %cst_3 = arith.constant 0xFF800000 : f32
    %6 = vector.broadcast %cst_3 : f32 to vector<16x128xf32>
    %7 = arith.select %5, %2, %6 : vector<16x128xi1>, vector<16x128xf32>
    %cst_4 = arith.constant dense<0xFF800000> : vector<16xf32>
    %8 = vector.multi_reduction <maximumf>, %7, %cst_4 [1] : vector<16x128xf32> to vector<16xf32>
    %9 = vector.shape_cast %8 : vector<16xf32> to vector<16x1xf32>
    %10 = vector.broadcast %9 : vector<16x1xf32> to vector<16x128xf32>
    %11 = arith.subf %7, %10 : vector<16x128xf32>
    %12 = math.exp %11 : vector<16x128xf32>
    %cst_5 = arith.constant dense<0.000000e+00> : vector<16xf32>
    %13 = vector.multi_reduction <add>, %12, %cst_5 [1] : vector<16x128xf32> to vector<16xf32>
    %14 = vector.shape_cast %13 : vector<16xf32> to vector<16x1xf32>
    %15 = tpu.reciprocal %14 {approx = true} : vector<16x1xf32> -> vector<16x1xf32>
    %16 = vector.broadcast %15 : vector<16x1xf32> to vector<16x128xf32>
    %17 = arith.mulf %12, %16 : vector<16x128xf32>
    %18 = arith.truncf %17 : vector<16x128xf32> to vector<16x128xbf16>
    %cst_6 = arith.constant dense<0.000000e+00> : vector<128x128xf32>
    %19 = tpu.matmul %18, %0, %cst_6 {dimension_numbers = #tpu.dot_dimension_numbers<[0], [0], [1], [1], [0, 1, 1, 1], [], []>} : vector<16x128xbf16>, vector<16x128xbf16>, vector<128x128xf32> -> vector<128x128xf32>
    %20 = arith.truncf %19 : vector<128x128xf32> to vector<128x128xbf16>
    %cst_7 = arith.constant dense<0.000000e+00> : vector<16x128xf32>
    %21 = tpu.matmul %18, %20, %cst_7 {dimension_numbers = #tpu.dot_dimension_numbers<[1], [0], [0], [1], [0, 0, 1, 1], [], []>} : vector<16x128xbf16>, vector<128x128xbf16>, vector<16x128xf32> -> vector<16x128xf32>
    %22 = arith.truncf %21 : vector<16x128xf32> to vector<16x128xbf16>
    %c0_8 = arith.constant 0 : index
    %c0_9 = arith.constant 0 : index
    %23 = vector.load %arg2[%c0_8, %c0_9] : memref<128x128xbf16, #tpu.memory_space<vmem>>, vector<128x128xbf16>
    %cst_10 = arith.constant dense<0.000000e+00> : vector<16x128xf32>
    %24 = tpu.matmul %22, %23, %cst_10 {dimension_numbers = #tpu.dot_dimension_numbers<[1], [0], [0], [1], [0, 0, 1, 1], [], []>} : vector<16x128xbf16>, vector<128x128xbf16>, vector<16x128xf32> -> vector<16x128xf32>
    %c0_11 = arith.constant 0 : index
    %c0_12 = arith.constant 0 : index
    %25 = vector.load %arg3[%c0_11, %c0_12] : memref<1x128xf32, #tpu.memory_space<vmem>>, vector<1x128xf32>
    %26 = vector.broadcast %25 : vector<1x128xf32> to vector<16x128xf32>
    %27 = arith.addf %24, %26 : vector<16x128xf32>
    %cst_13 = arith.constant 0.000000e+00 : f32
    %28 = vector.broadcast %cst_13 : f32 to vector<16x128xf32>
    %29 = arith.maximumf %27, %28 : vector<16x128xf32>
    %c0_14 = arith.constant 0 : index
    %c0_15 = arith.constant 0 : index
    %30 = vector.load %arg4[%c0_14, %c0_15] : memref<16x128xf32, #tpu.memory_space<vmem>>, vector<16x128xf32>
    tpu.vector_store %arg4[%c0_14, %c0_15], %29 {strides = array<i32>} : memref<16x128xf32, #tpu.memory_space<vmem>>, vector<16x128xf32>,
    return
  }
}

</mosaic_0001>

<llo_original>
// kernel: tpu_custom_call.1
$region0: #{tpu_custom_call.1}
  #allocation0 [shape = 'u32[]', space=smem, size = 0x4, offset = 0x4, fixed_abs, tag = 'smem constant byte address 0x4 - core index']
  #allocation1 [shape = 'u32[144,128]{1,0:T(1,128)}', space=vmem, size = 0x12000, scoped, tag = 'internal scratch']
  %s0 = inlined_call_operand.hbm [shape: bf16[16,128], index: 0, kind: input, shape index: {}]
  %s1 = inlined_call_operand.hbm [shape: bf16[128,128], index: 1, kind: input, shape index: {}]
  %s2 = inlined_call_operand.hbm [shape: bf16[128,128], index: 2, kind: input, shape index: {}]
  %s3 = inlined_call_operand.vmem [shape: f32[1,128], index: 3, kind: input, shape index: {}]
  %s4 = inlined_call_operand.hbm [shape: f32[16,128], index: 4, kind: output, shape index: {}]
  %s5 = sld [smem:[#allocation0]]
  $region38: #{tpu_custom_call.1} parent=0
    _
  %s7 = ssub.s32 1, %s5
  %s8 = scalar_select 0, %s7, %s5
  $region1: #{tpu_custom_call.1} parent=0
    #allocation2 [shape = 'u8[4096]{0}', space=vmem, size = 0x1000, scoped, tag = 'input window, operand 0, single buffered']
    #allocation3 [shape = 's32[1]{0}', space=sflag, size = 0x4, scoped, tag = 'scoped memory for tpu_custom_call.1']
    #allocation4 [shape = 's32[1]{0}', space=sflag, size = 0x4, scoped, tag = 'scoped memory for tpu_custom_call.1']
    #allocation5 [shape = 'u8[32768]{0}', space=vmem, size = 0x8000, scoped, tag = 'input window, operand 1, single buffered']
    #allocation6 [shape = 's32[1]{0}', space=sflag, size = 0x4, scoped, tag = 'scoped memory for tpu_custom_call.1']
    #allocation7 [shape = 'u8[32768]{0}', space=vmem, size = 0x8000, scoped, tag = 'input window, operand 2, single buffered']
    #allocation8 [shape = 'u8[8192]{0}', space=vmem, size = 0x2000, scoped, tag = 'output window, operand 0, single buffered']
    %9 = vsyncpa [#allocation3], 0
    %10 = vsyncpa [#allocation6], 0
    %11 = vsyncpa [#allocation4], 0
    // Predicated region
    $region2: #{tpu_custom_call.1} parent=1 // pred_check
      _
    $region3: #{tpu_custom_call.1} parent=1 // pred_check_branch
      %13 = sbr.rel (0) target = $region5
    $region4: #{tpu_custom_call.1} parent=1 // pred_region
      %s15 = ssub.s32 128, 128
      %16 = vsyncadd [#allocation3], %s15
      %s17 = sshll.u32 [#allocation2], 4
      %s18 = int_to_ptr.vmem [resolvable:$true] %s17
      %23 = dma.hbm_to_vmem [thread:$0]  %s0, 128, %s18, [#allocation3], 64, 64, 4
    $region5: #{tpu_custom_call.1} parent=1 // pred_fallthru
      _
    // Predicated region
    $region6: #{tpu_custom_call.1} parent=1 // pred_check
      _
    $region7: #{tpu_custom_call.1} parent=1 // pred_check_branch
      %25 = sbr.rel (0) target = $region9
    $region8: #{tpu_custom_call.1} parent=1 // pred_region
      %s27 = ssub.s32 1024, 1024
      %28 = vsyncadd [#allocation6], %s27
      %s29 = sshll.u32 [#allocation5], 4
      %s30 = int_to_ptr.vmem [resolvable:$true] %s29
      %35 = dma.hbm_to_vmem [thread:$0]  %s1, 1024, %s30, [#allocation6], 64, 64, 4
    $region9: #{tpu_custom_call.1} parent=1 // pred_fallthru
      _
    // Predicated region
    $region10: #{tpu_custom_call.1} parent=1 // pred_check
      _
    $region11: #{tpu_custom_call.1} parent=1 // pred_check_branch
      %37 = sbr.rel (0) target = $region13
    $region12: #{tpu_custom_call.1} parent=1 // pred_region
      %s39 = ssub.s32 1024, 1024
      %40 = vsyncadd [#allocation6], %s39
      %s41 = sshll.u32 [#allocation7], 4
      %s42 = int_to_ptr.vmem [resolvable:$true] %s41
      %47 = dma.hbm_to_vmem [thread:$0]  %s2, 1024, %s42, [#allocation6], 64, 64, 4
    $region13: #{tpu_custom_call.1} parent=1 // pred_fallthru
      _
    // Predicated region
    $region14: #{tpu_custom_call.1} parent=1 // pred_check
      _
    $region15: #{tpu_custom_call.1} parent=1 // pred_check_branch
      %49 = sbr.rel (0) target = $region17
    $region16: #{tpu_custom_call.1} parent=1 // pred_region
      _
    $region17: #{tpu_custom_call.1} parent=1 // pred_fallthru
      _
    // Predicated region
    $region18: #{tpu_custom_call.1} parent=1 // pred_check
      _
    $region19: #{tpu_custom_call.1} parent=1 // pred_check_branch
      %51 = sbr.rel (0) target = $region21
    $region20: #{tpu_custom_call.1} parent=1 // pred_region
      %52 = dma.done [#allocation3], 128
    $region21: #{tpu_custom_call.1} parent=1 // pred_fallthru
      _
    // Predicated region
    $region22: #{tpu_custom_call.1} parent=1 // pred_check
      _
    $region23: #{tpu_custom_call.1} parent=1 // pred_check_branch
      %54 = sbr.rel (0) target = $region25
    $region24: #{tpu_custom_call.1} parent=1 // pred_region
      %55 = dma.done [#allocation6], 1024
    $region25: #{tpu_custom_call.1} parent=1 // pred_fallthru
      _
    // Predicated region
    $region26: #{tpu_custom_call.1} parent=1 // pred_check
      _
    $region27: #{tpu_custom_call.1} parent=1 // pred_check_branch
      %57 = sbr.rel (0) target = $region29
    $region28: #{tpu_custom_call.1} parent=1 // pred_region
      %58 = dma.done [#allocation6], 1024
    $region29: #{tpu_custom_call.1} parent=1 // pred_fallthru
      _
    %v60 = vld [vmem:[#allocation2] sm:$0xf]
    %v61 = vld [vmem:[#allocation2 + $0x4] sm:$0xf]
    %v62 = vld [vmem:[#allocation5] sm:$0xf]
    %v63 = vld [vmem:[#allocation5 + $0x4] sm:$0xf]
    %v64 = vld [vmem:[#allocation5 + $0x8] sm:$0xf]
    %v65 = vld [vmem:[#allocation5 + $0xc] sm:$0xf]
    %v66 = vld [vmem:[#allocation5 + $0x10] sm:$0xf]
    %v67 = vld [vmem:[#allocation5 + $0x14] sm:$0xf]
    %v68 = vld [vmem:[#allocation5 + $0x18] sm:$0xf]
    %v69 = vld [vmem:[#allocation5 + $0x1c] sm:$0xf]
    %v70 = vld [vmem:[#allocation5 + $0x20] sm:$0xf]
    %v71 = vld [vmem:[#allocation5 + $0x24] sm:$0xf]
    %v72 = vld [vmem:[#allocation5 + $0x28] sm:$0xf]
    %v73 = vld [vmem:[#allocation5 + $0x2c] sm:$0xf]
    %v74 = vld [vmem:[#allocation5 + $0x30] sm:$0xf]
    %v75 = vld [vmem:[#allocation5 + $0x34] sm:$0xf]
    %v76 = vld [vmem:[#allocation5 + $0x38] sm:$0xf]
    %v77 = vld [vmem:[#allocation5 + $0x3c] sm:$0xf]
    %v80 = vunpack.c.l.b16 %v60
    %v81 = vunpack.c.l.b16 %v61
    %v82 = vpack.c.b16 %v81, %v80
    %v100 = vunpack.c.l.b16 %v62
    %v101 = vunpack.c.l.b16 %v63
    %v102 = vunpack.c.l.b16 %v64
    %v103 = vunpack.c.l.b16 %v65
    %v104 = vunpack.c.l.b16 %v66
    %v105 = vunpack.c.l.b16 %v67
    %v106 = vunpack.c.l.b16 %v68
    %v107 = vunpack.c.l.b16 %v69
    %v108 = vunpack.c.l.b16 %v70
    %v109 = vunpack.c.l.b16 %v71
    %v110 = vunpack.c.l.b16 %v72
    %v111 = vunpack.c.l.b16 %v73
    %v112 = vunpack.c.l.b16 %v74
    %v113 = vunpack.c.l.b16 %v75
    %v114 = vunpack.c.l.b16 %v76
    %v115 = vunpack.c.l.b16 %v77
    %v116 = vpack.c.b16 %v101, %v100
    %v117 = vpack.c.b16 %v103, %v102
    %v118 = vpack.c.b16 %v105, %v104
    %v119 = vpack.c.b16 %v107, %v106
    %v120 = vpack.c.b16 %v109, %v108
    %v121 = vpack.c.b16 %v111, %v110
    %v122 = vpack.c.b16 %v113, %v112
    %v123 = vpack.c.b16 %v115, %v114
    %132 = vmatprep.subr.bf16.mxu0 0
    %133 = vmatpush1.bf16.msra.mxu0 %v116
    %134 = vmatprep.subr.bf16.mxu0 0
    %135 = vmatpush1.bf16.msra.mxu0 %v117
    %136 = vmatprep.subr.bf16.mxu0 0
    %137 = vmatpush1.bf16.msra.mxu0 %v118
    %138 = vmatprep.subr.bf16.mxu0 0
    %139 = vmatpush1.bf16.msra.mxu0 %v119
    %140 = vmatprep.subr.bf16.mxu0 0
    %141 = vmatpush1.bf16.msra.mxu0 %v120
    %142 = vmatprep.subr.bf16.mxu0 0
    %143 = vmatpush1.bf16.msra.mxu0 %v121
    %144 = vmatprep.subr.bf16.mxu0 0
    %145 = vmatpush1.bf16.msra.mxu0 %v122
    %146 = vmatprep.subr.bf16.mxu0 0
    %147 = vmatpush1.bf16.msra.mxu0 %v123
    %148 = vmatprep.subr.bf16.mxu0 0
    %149 = vmatpush1.bf16.msra.mxu0 0
    %150 = vmatprep.subr.bf16.mxu0 0
    %151 = vmatpush1.bf16.msra.mxu0 0
    %152 = vmatprep.subr.bf16.mxu0 0
    %153 = vmatpush1.bf16.msra.mxu0 0
    %154 = vmatprep.subr.bf16.mxu0 0
    %155 = vmatpush1.bf16.msra.mxu0 0
    %156 = vmatprep.subr.bf16.mxu0 0
    %157 = vmatpush1.bf16.msra.mxu0 0
    %158 = vmatprep.subr.bf16.mxu0 0
    %159 = vmatpush1.bf16.msra.mxu0 0
    %160 = vmatprep.subr.bf16.mxu0 0
    %161 = vmatpush1.bf16.msra.mxu0 0
    %162 = vmatprep.subr.bf16.mxu0 0
    %163 = vmatpush1.bf16.msra.mxu0 0
    %164 = vmatprep.mubr.bf16.mxu0 0
    %165 = vmatmul.mubr.bf16.gmra.mrb[0].mxu0 %v82
    %v166 = vpop.f32.mrb[0].mxu0
    %v167 = vadd.f32 0.0, %v166
    %v168 = vpop.f32.mrb[0].mxu0
    %v169 = vpop.f32.mrb[0].mxu0
    %v170 = vadd.f32 0.0, %v169
    %v171 = vpop.f32.mrb[0].mxu0
    %172 = vdwg.mxu0
    %v173 = vlaneseq
    %v174 = vand.u32 %v173, 127
    %vm175 = vcmp.lt.s32.totalorder %v174, 8
    %v176 = vsel %vm175, %v167, -inf
    %v177 = vsel %vm175, %v170, -inf
    %178 = vmax.xlane.f32.xlu0 %v176
    %v179 = vpop.xlane.xlu0 %178
    %180 = vmax.xlane.f32.xlu0 %v177
    %v181 = vpop.xlane.xlu0 %180
    %v182 = vsub.f32 %v176, %v179
    %v183 = vsub.f32 %v177, %v181
    %v184 = vmul.f32 %v182, 1.442695
    %v185 = vpow.pop %v184
    %v186 = vmul.f32 %v183, 1.442695
    %v187 = vpow.pop %v186
    %188 = vadd.xlane.f32.xlu0 %v185
    %v189 = vpop.xlane.xlu0 %188
    %190 = vadd.xlane.f32.xlu0 %v187
    %v191 = vpop.xlane.xlu0 %190
    %v192 = vrcp.pop %v189
    %v193 = vrcp.pop %v191
    %v194 = vmul.f32 %v185, %v192
    %v195 = vmul.f32 %v187, %v193
    %v196 = vpack.c.bf16 %v195, %v194
    %197 = vxpose.xlu0.c.b16.start [1/8] %v196, 128
    %198 = vxpose.xlu0.c.b16.cont [2/8] 0, 128
    %199 = vxpose.xlu0.c.b16.cont [3/8] 0, 128
    %200 = vxpose.xlu0.c.b16.cont [4/8] 0, 128
    %201 = vxpose.xlu0.c.b16.cont [5/8] 0, 128
    %202 = vxpose.xlu0.c.b16.cont [6/8] 0, 128
    %203 = vxpose.xlu0.c.b16.cont [7/8] 0, 128
    %204 = vxpose.xlu0.c.b16.end [8/8] 0, 128
    %v205 = vpop.trf.xlu0
    %v206 = vpop.trf.xlu0
    %v207 = vpop.trf.xlu0
    %v208 = vpop.trf.xlu0
    %v209 = vpop.trf.xlu0
    %v210 = vpop.trf.xlu0
    %v211 = vpop.trf.xlu0
    %v212 = vpop.trf.xlu0
    %vm213 = vcmask 130048
    %v215 = vsel %vm213, %v205, 0
    %v218 = vsel %vm213, %v206, 0
    %v221 = vsel %vm213, %v207, 0
    %v224 = vsel %vm213, %v208, 0
    %v227 = vsel %vm213, %v209, 0
    %v230 = vsel %vm213, %v210, 0
    %v233 = vsel %vm213, %v211, 0
    %v236 = vsel %vm213, %v212, 0
    %238 = vmatprep.subr.bf16.mxu0 0
    %239 = vmatpush1.bf16.msra.mxu0 %v82
    %240 = vmatprep.subr.bf16.mxu0 0
    %241 = vmatpush1.bf16.msra.mxu0 0
    %242 = vmatprep.subr.bf16.mxu0 0
    %243 = vmatpush1.bf16.msra.mxu0 0
    %244 = vmatprep.subr.bf16.mxu0 0
    %245 = vmatpush1.bf16.msra.mxu0 0
    %246 = vmatprep.subr.bf16.mxu0 0
    %247 = vmatpush1.bf16.msra.mxu0 0
    %248 = vmatprep.subr.bf16.mxu0 0
    %249 = vmatpush1.bf16.msra.mxu0 0
    %250 = vmatprep.subr.bf16.mxu0 0
    %251 = vmatpush1.bf16.msra.mxu0 0
    %252 = vmatprep.subr.bf16.mxu0 0
    %253 = vmatpush1.bf16.msra.mxu0 0
    %254 = vmatprep.subr.bf16.mxu0 0
    %255 = vmatpush1.bf16.msra.mxu0 0
    %256 = vmatprep.subr.bf16.mxu0 0
    %257 = vmatpush1.bf16.msra.mxu0 0
    %258 = vmatprep.subr.bf16.mxu0 0
    %259 = vmatpush1.bf16.msra.mxu0 0
    %260 = vmatprep.subr.bf16.mxu0 0
    %261 = vmatpush1.bf16.msra.mxu0 0
    %262 = vmatprep.subr.bf16.mxu0 0
    %263 = vmatpush1.bf16.msra.mxu0 0
    %264 = vmatprep.subr.bf16.mxu0 0
    %265 = vmatpush1.bf16.msra.mxu0 0
    %266 = vmatprep.subr.bf16.mxu0 0
    %267 = vmatpush1.bf16.msra.mxu0 0
    %268 = vmatprep.subr.bf16.mxu0 0
    %269 = vmatpush1.bf16.msra.mxu0 0
    %270 = vmatprep.mubr.bf16.mxu0 0
    %271 = vmatmul.mubr.bf16.gmra.mrb[0].mxu0 %v215
    %v272 = vpop.f32.mrb[0].mxu0
    %v273 = vadd.f32 0.0, %v272
    %v274 = vpop.f32.mrb[0].mxu0
    %v275 = vpop.f32.mrb[0].mxu0
    %v276 = vadd.f32 0.0, %v275
    %v277 = vpop.f32.mrb[0].mxu0
    %278 = vmatprep.mubr.bf16.mxu0 0
    %279 = vmatmul.mubr.bf16.gmra.mrb[0].mxu0 %v218
    %v280 = vpop.f32.mrb[0].mxu0
    %v281 = vadd.f32 0.0, %v280
    %v282 = vpop.f32.mrb[0].mxu0
    %v283 = vpop.f32.mrb[0].mxu0
    %v284 = vadd.f32 0.0, %v283
    %v285 = vpop.f32.mrb[0].mxu0
    %286 = vmatprep.mubr.bf16.mxu0 0
    %287 = vmatmul.mubr.bf16.gmra.mrb[0].mxu0 %v221
    %v288 = vpop.f32.mrb[0].mxu0
    %v289 = vadd.f32 0.0, %v288
    %v290 = vpop.f32.mrb[0].mxu0
    %v291 = vpop.f32.mrb[0].mxu0
    %v292 = vadd.f32 0.0, %v291
    %v293 = vpop.f32.mrb[0].mxu0
    %294 = vmatprep.mubr.bf16.mxu0 0
    %295 = vmatmul.mubr.bf16.gmra.mrb[0].mxu0 %v224
    %v296 = vpop.f32.mrb[0].mxu0
    %v297 = vadd.f32 0.0, %v296
    %v298 = vpop.f32.mrb[0].mxu0
    %v299 = vpop.f32.mrb[0].mxu0
    %v300 = vadd.f32 0.0, %v299
    %v301 = vpop.f32.mrb[0].mxu0
    %302 = vmatprep.mubr.bf16.mxu0 0
    %303 = vmatmul.mubr.bf16.gmra.mrb[0].mxu0 %v227
    %v304 = vpop.f32.mrb[0].mxu0
    %v305 = vadd.f32 0.0, %v304
    %v306 = vpop.f32.mrb[0].mxu0
    %v307 = vpop.f32.mrb[0].mxu0
    %v308 = vadd.f32 0.0, %v307
    %v309 = vpop.f32.mrb[0].mxu0
    %310 = vmatprep.mubr.bf16.mxu0 0
    %311 = vmatmul.mubr.bf16.gmra.mrb[0].mxu0 %v230
    %v312 = vpop.f32.mrb[0].mxu0
    %v313 = vadd.f32 0.0, %v312
    %v314 = vpop.f32.mrb[0].mxu0
    %v315 = vpop.f32.mrb[0].mxu0
    %v316 = vadd.f32 0.0, %v315
    %v317 = vpop.f32.mrb[0].mxu0
    %318 = vmatprep.mubr.bf16.mxu0 0
    %319 = vmatmul.mubr.bf16.gmra.mrb[0].mxu0 %v233
    %v320 = vpop.f32.mrb[0].mxu0
    %v321 = vadd.f32 0.0, %v320
    %v322 = vpop.f32.mrb[0].mxu0
    %v323 = vpop.f32.mrb[0].mxu0
    %v324 = vadd.f32 0.0, %v323
    %v325 = vpop.f32.mrb[0].mxu0
    %326 = vmatprep.mubr.bf16.mxu0 0
    %327 = vmatmul.mubr.bf16.gmra.mrb[0].mxu0 %v236
    %v328 = vpop.f32.mrb[0].mxu0
    %v329 = vadd.f32 0.0, %v328
    %v330 = vpop.f32.mrb[0].mxu0
    %v331 = vpop.f32.mrb[0].mxu0
    %v332 = vadd.f32 0.0, %v331
    %v333 = vpop.f32.mrb[0].mxu0
    %334 = vdwg.mxu0
    %v335 = vpack.c.bf16 %v276, %v273
    %v336 = vpack.c.bf16 %v284, %v281
    %v337 = vpack.c.bf16 %v292, %v289
    %v338 = vpack.c.bf16 %v300, %v297
    %v339 = vpack.c.bf16 %v308, %v305
    %v340 = vpack.c.bf16 %v316, %v313
    %v341 = vpack.c.bf16 %v324, %v321
    %v342 = vpack.c.bf16 %v332, %v329
    %343 = vmatprep.subr.bf16.mxu0 0
    %344 = vmatpush1.bf16.msra.mxu0 %v335
    %345 = vmatprep.subr.bf16.mxu0 0
    %346 = vmatpush1.bf16.msra.mxu0 %v336
    %347 = vmatprep.subr.bf16.mxu0 0
    %348 = vmatpush1.bf16.msra.mxu0 %v337
    %349 = vmatprep.subr.bf16.mxu0 0
    %350 = vmatpush1.bf16.msra.mxu0 %v338
    %351 = vmatprep.subr.bf16.mxu0 0
    %352 = vmatpush1.bf16.msra.mxu0 %v339
    %353 = vmatprep.subr.bf16.mxu0 0
    %354 = vmatpush1.bf16.msra.mxu0 %v340
    %355 = vmatprep.subr.bf16.mxu0 0
    %356 = vmatpush1.bf16.msra.mxu0 %v341
    %357 = vmatprep.subr.bf16.mxu0 0
    %358 = vmatpush1.bf16.msra.mxu0 %v342
    %359 = vmatprep.subr.bf16.mxu0 0
    %360 = vmatpush1.bf16.msra.mxu0 0
    %361 = vmatprep.subr.bf16.mxu0 0
    %362 = vmatpush1.bf16.msra.mxu0 0
    %363 = vmatprep.subr.bf16.mxu0 0
    %364 = vmatpush1.bf16.msra.mxu0 0
    %365 = vmatprep.subr.bf16.mxu0 0
    %366 = vmatpush1.bf16.msra.mxu0 0
    %367 = vmatprep.subr.bf16.mxu0 0
    %368 = vmatpush1.bf16.msra.mxu0 0
    %369 = vmatprep.subr.bf16.mxu0 0
    %370 = vmatpush1.bf16.msra.mxu0 0
    %371 = vmatprep.subr.bf16.mxu0 0
    %372 = vmatpush1.bf16.msra.mxu0 0
    %373 = vmatprep.subr.bf16.mxu0 0
    %374 = vmatpush1.bf16.msra.mxu0 0
    %375 = vmatprep.mubr.bf16.mxu0 0
    %376 = vmatmul.mubr.bf16.gmra.mrb[0].mxu0 %v196
    %v377 = vpop.f32.mrb[0].mxu0
    %v378 = vadd.f32 0.0, %v377
    %v379 = vpop.f32.mrb[0].mxu0
    %v380 = vpop.f32.mrb[0].mxu0
    %v381 = vadd.f32 0.0, %v380
    %v382 = vpop.f32.mrb[0].mxu0
    %383 = vdwg.mxu0
    %v384 = vpack.c.bf16 %v381, %v378
    %v385 = vld [vmem:[#allocation7] sm:$0xf]
    %v386 = vld [vmem:[#allocation7 + $0x4] sm:$0xf]
    %v387 = vld [vmem:[#allocation7 + $0x8] sm:$0xf]
    %v388 = vld [vmem:[#allocation7 + $0xc] sm:$0xf]
    %v389 = vld [vmem:[#allocation7 + $0x10] sm:$0xf]
    %v390 = vld [vmem:[#allocation7 + $0x14] sm:$0xf]
    %v391 = vld [vmem:[#allocation7 + $0x18] sm:$0xf]
    %v392 = vld [vmem:[#allocation7 + $0x1c] sm:$0xf]
    %v393 = vld [vmem:[#allocation7 + $0x20] sm:$0xf]
    %v394 = vld [vmem:[#allocation7 + $0x24] sm:$0xf]
    %v395 = vld [vmem:[#allocation7 + $0x28] sm:$0xf]
    %v396 = vld [vmem:[#allocation7 + $0x2c] sm:$0xf]
    %v397 = vld [vmem:[#allocation7 + $0x30] sm:$0xf]
    %v398 = vld [vmem:[#allocation7 + $0x34] sm:$0xf]
    %v399 = vld [vmem:[#allocation7 + $0x38] sm:$0xf]
    %v400 = vld [vmem:[#allocation7 + $0x3c] sm:$0xf]
    %v401 = vld [vmem:[%s3] sm:$0x1]
    %v403 = vlaneseq
    %v404 = vshrl.u32 %v403, 7
    %v405 = vsub.s32 0, %v404
    %v406 = vrot.slane %v401, %v405
    %v424 = vunpack.c.l.b16 %v385
    %v425 = vunpack.c.l.b16 %v386
    %v426 = vunpack.c.l.b16 %v387
    %v427 = vunpack.c.l.b16 %v388
    %v428 = vunpack.c.l.b16 %v389
    %v429 = vunpack.c.l.b16 %v390
    %v430 = vunpack.c.l.b16 %v391
    %v431 = vunpack.c.l.b16 %v392
    %v432 = vunpack.c.l.b16 %v393
    %v433 = vunpack.c.l.b16 %v394
    %v434 = vunpack.c.l.b16 %v395
    %v435 = vunpack.c.l.b16 %v396
    %v436 = vunpack.c.l.b16 %v397
    %v437 = vunpack.c.l.b16 %v398
    %v438 = vunpack.c.l.b16 %v399
    %v439 = vunpack.c.l.b16 %v400
    %v440 = vpack.c.b16 %v425, %v424
    %v441 = vpack.c.b16 %v427, %v426
    %v442 = vpack.c.b16 %v429, %v428
    %v443 = vpack.c.b16 %v431, %v430
    %v444 = vpack.c.b16 %v433, %v432
    %v445 = vpack.c.b16 %v435, %v434
    %v446 = vpack.c.b16 %v437, %v436
    %v447 = vpack.c.b16 %v439, %v438
    %456 = vmatprep.subr.bf16.mxu0 0
    %457 = vmatpush1.bf16.msra.mxu0 %v440
    %458 = vmatprep.subr.bf16.mxu0 0
    %459 = vmatpush1.bf16.msra.mxu0 %v441
    %460 = vmatprep.subr.bf16.mxu0 0
    %461 = vmatpush1.bf16.msra.mxu0 %v442
    %462 = vmatprep.subr.bf16.mxu0 0
    %463 = vmatpush1.bf16.msra.mxu0 %v443
    %464 = vmatprep.subr.bf16.mxu0 0
    %465 = vmatpush1.bf16.msra.mxu0 %v444
    %466 = vmatprep.subr.bf16.mxu0 0
    %467 = vmatpush1.bf16.msra.mxu0 %v445
    %468 = vmatprep.subr.bf16.mxu0 0
    %469 = vmatpush1.bf16.msra.mxu0 %v446
    %470 = vmatprep.subr.bf16.mxu0 0
    %471 = vmatpush1.bf16.msra.mxu0 %v447
    %472 = vmatprep.subr.bf16.mxu0 0
    %473 = vmatpush1.bf16.msra.mxu0 0
    %474 = vmatprep.subr.bf16.mxu0 0
    %475 = vmatpush1.bf16.msra.mxu0 0
    %476 = vmatprep.subr.bf16.mxu0 0
    %477 = vmatpush1.bf16.msra.mxu0 0
    %478 = vmatprep.subr.bf16.mxu0 0
    %479 = vmatpush1.bf16.msra.mxu0 0
    %480 = vmatprep.subr.bf16.mxu0 0
    %481 = vmatpush1.bf16.msra.mxu0 0
    %482 = vmatprep.subr.bf16.mxu0 0
    %483 = vmatpush1.bf16.msra.mxu0 0
    %484 = vmatprep.subr.bf16.mxu0 0
    %485 = vmatpush1.bf16.msra.mxu0 0
    %486 = vmatprep.subr.bf16.mxu0 0
    %487 = vmatpush1.bf16.msra.mxu0 0
    %488 = vmatprep.mubr.bf16.mxu0 0
    %489 = vmatmul.mubr.bf16.gmra.mrb[0].mxu0 %v384
    %v490 = vpop.f32.mrb[0].mxu0
    %v491 = vadd.f32 %v406, %v490
    %v492 = vpop.f32.mrb[0].mxu0
    %v493 = vpop.f32.mrb[0].mxu0
    %v494 = vadd.f32 %v406, %v493
    %v495 = vpop.f32.mrb[0].mxu0
    %496 = vdwg.mxu0
    %v497 = vmax.f32 %v491, 0.0
    %v498 = vmax.f32 %v494, 0.0
    %499 = vst [vmem:[#allocation8] sm:$0xff] %v497
    %500 = vst [vmem:[#allocation8 + $0x8] sm:$0xff] %v498
    // Predicated region
    $region30: #{tpu_custom_call.1} parent=1 // pred_check
      _
    $region31: #{tpu_custom_call.1} parent=1 // pred_check_branch
      %502 = sbr.rel (0) target = $region33
    $region32: #{tpu_custom_call.1} parent=1 // pred_region
      %s504 = ssub.s32 256, 256
      %505 = vsyncadd [#allocation4], %s504
      %s506 = sshll.u32 [#allocation8], 4
      %s507 = int_to_ptr.vmem [resolvable:$true] %s506
      %512 = dma.vmem_to_hbm [thread:$0]  %s507, 256, %s4, [#allocation4], 128, 128, 8
    $region33: #{tpu_custom_call.1} parent=1 // pred_fallthru
      _
    // Predicated region
    $region34: #{tpu_custom_call.1} parent=1 // pred_check
      _
    $region35: #{tpu_custom_call.1} parent=1 // pred_check_branch
      %514 = sbr.rel (0) target = $region37
    $region36: #{tpu_custom_call.1} parent=1 // pred_region
      %515 = dma.done [#allocation4], 256
    $region37: #{tpu_custom_call.1} parent=1 // pred_fallthru
      _
    %516 = vsyncpa [#allocation3], 1
    %517 = vsyncpa [#allocation6], 1
    %518 = vsyncpa [#allocation4], 1

</llo_original>
